<compile_context>
chip_gen: v7x
topology: tpu7x:2x2x1
jax: 0.10.0
libtpu: 0.0.40
codegen_flags: <defaults>
</compile_context>

<pallas_src>
import functools

import jax
import jax.numpy as jnp
from jax.experimental import pallas as pl
from jax.experimental.pallas import tpu as pltpu


# --------------------------------------------------------------------------- #
# Kernel 1: streaming masked-max reduce over the sequence axis + log1p.
# --------------------------------------------------------------------------- #
def _splade_reduce_kernel(emb_ref, mask_ref, x_ref, acc_ref):
    """One grid step: one batch block x one sequence tile.

    emb_ref : (bb, tl, V) VMEM, native dtype
    mask_ref: (bb, tl, 1) VMEM, same dtype (0/1) -> pure lane broadcast over V
    x_ref   : (bb, V)     VMEM f32, revisited across the L axis, written last step
    acc_ref : (bb, V)     VMEM scratch in the input dtype, running max
    """
    l = pl.program_id(1)
    n_l = pl.num_programs(1)

    @pl.when(l == 0)
    def _():
        # 0 is the identity: with a 0/1 mask, max(0, e*m) == relu(e)*m.
        acc_ref[...] = jnp.zeros_like(acc_ref)

    emb = emb_ref[...]                                  # (bb, tl, V) native dtype
    mask = mask_ref[...]                                # (bb, tl, 1) native dtype
    # relu dropped (see header); 0/1-mask multiply and max are exact in bf16.
    contrib = jnp.max(emb * mask, axis=1)               # (bb, V)
    acc_ref[...] = jnp.maximum(acc_ref[...], contrib)

    @pl.when(l == n_l - 1)
    def _():
        # log1p hoisted outside the seq reduction (binary mask assumption).
        x_ref[...] = jnp.log1p(acc_ref[...].astype(jnp.float32))


# --------------------------------------------------------------------------- #
# Kernel 2: top-k selection on the dense x[B, V], zeros elsewhere.
# --------------------------------------------------------------------------- #
def _splade_topk_kernel(x_ref, out_ref, *, top_k: int):
    """One grid step: one batch block.

    x_ref  : (bb, V) VMEM f32, values >= 0 (log1p of non-negative)
    out_ref: (bb, V) VMEM, top_k values kept per row, zeros elsewhere
    """
    x = x_ref[...]                                       # (bb, V) f32
    bb, v = x.shape
    # (1, V) iota broadcast over sublanes; generated on the fly (no VMEM re-read
    # of a materialized (bb, V) int32 array each iteration).
    lane_iota = jax.lax.broadcasted_iota(jnp.int32, (1, v), 1)
    knockout = jnp.float32(-1.0)                         # below any real value

    def select_one(carry):
        work, out = carry
        cur_max = jnp.max(work, axis=1, keepdims=True)                   # (bb, 1)
        # first-occurring index among ties (matches lax.top_k ordering)
        first_idx = jnp.min(jnp.where(work == cur_max, lane_iota, v),
                            axis=1, keepdims=True)                       # (bb, 1)
        sel = lane_iota == first_idx                                     # (bb, V)
        out = jnp.where(sel, cur_max, out)      # write the reduced max directly
        work = jnp.where(sel, knockout, work)
        return work, out

    init = (x, jnp.zeros_like(x))
    if top_k <= 8:                       # unroll short loops for LLO visibility
        carry = init
        for _ in range(top_k):
            carry = select_one(carry)
    else:                                # bound live ranges for large k
        carry = jax.lax.fori_loop(0, top_k, lambda _, c: select_one(c), init)

    _, out = carry
    out_ref[...] = out.astype(out_ref.dtype)


# --------------------------------------------------------------------------- #
# Wrapper
# --------------------------------------------------------------------------- #
def splade_pooler(embeddings: jax.Array, attention_mask: jax.Array, top_k: int) -> jax.Array:
    """Pallas implementation of SpladePooler.forward.

    embeddings     : [B, L, V] float (kept in its native dtype end-to-end)
    attention_mask : [B, L]    binary 0/1 mask (float or int)
    returns        : [B, V]    top_k values kept per row, zeros elsewhere

    NOTE: the relu removal and the log1p hoist are exact only for a strictly
    binary 0/1 attention mask (the standard SPLADE setting).
    """
    B, L, V = embeddings.shape
    assert attention_mask.shape == (B, L)

    emb_dtype = embeddings.dtype
    if not jnp.issubdtype(emb_dtype, jnp.floating):
        embeddings = embeddings.astype(jnp.float32)
        emb_dtype = jnp.dtype(jnp.float32)
    out_dtype = emb_dtype                       # pinned to embeddings dtype
    emb_bytes = jnp.dtype(emb_dtype).itemsize
    top_k = int(min(int(top_k), V))

    # ---- batch blocking (output block sublane dim must be mult of 8 or full B) --
    if B <= 8:
        block_b, B_pad = B, B
    else:
        block_b, B_pad = 8, pl.cdiv(B, 8) * 8

    # ---- dtype-aware sublane multiple: 8 (f32) / 16 (bf16) / 32 (int8/fp8) -----
    sub = max(8, 32 // emb_bytes)

    # ---- VMEM budget (per TensorCore; conservative so v7x's 64 MiB fits) -------
    try:
        vmem_cap = int(pltpu.get_tpu_info().vmem_capacity_bytes)
    except Exception:
        vmem_cap = 64 << 20
    vmem_cap = min(vmem_cap, 128 << 20)
    tile_budget = max(1 << 20, vmem_cap // 16)   # reduce is HBM-bound: small tiles are free

    L_pad_sub = pl.cdiv(L, sub) * sub
    tl_budget = max(sub, tile_budget // max(1, block_b * V * emb_bytes))
    tile_l = max(sub, (tl_budget // sub) * sub)
    tile_l = min(tile_l, L_pad_sub)
    num_l = pl.cdiv(L, tile_l)
    L_pad = num_l * tile_l

    # ---- mask cast to the compute dtype (exact for 0/1) + lane-broadcast shape -
    mask3 = attention_mask.astype(emb_dtype).reshape(B, L, 1)
    if B_pad != B or L_pad != L:
        # zero padding is neutral: e*m = 0 never exceeds the 0-initialized max
        embeddings = jnp.pad(embeddings, ((0, B_pad - B), (0, L_pad - L), (0, 0)))
        mask3 = jnp.pad(mask3, ((0, B_pad - B), (0, L_pad - L), (0, 0)))

    # ---- rough per-core VMEM footprint: 2 emb + 2 mask bufs, acc, 2 out bufs ---
    est = (2 * block_b * tile_l * V * emb_bytes
           + 2 * block_b * tile_l * emb_bytes
           + block_b * V * emb_bytes
           + 2 * block_b * V * 4)
    vmem_limit = int(min(vmem_cap, max(32 << 20, 2 * est)))

    # ---------------------- call 1: streaming reduce ----------------------------
    grid1 = (B_pad // block_b, num_l)
    cost1 = pl.CostEstimate(
        flops=2 * B_pad * L_pad * V,
        transcendentals=B_pad * V,
        bytes_accessed=(B_pad * L_pad * V * emb_bytes
                        + B_pad * L_pad * emb_bytes
                        + B_pad * V * 4),
    )
    x = pl.pallas_call(
        _splade_reduce_kernel,
        out_shape=jax.ShapeDtypeStruct((B_pad, V), jnp.float32),
        grid=grid1,
        in_specs=[
            pl.BlockSpec((block_b, tile_l, V), lambda i, l: (i, l, 0)),
            pl.BlockSpec((block_b, tile_l, 1), lambda i, l: (i, l, 0)),
        ],
        out_specs=pl.BlockSpec((block_b, V), lambda i, l: (i, 0)),
        scratch_shapes=[pltpu.VMEM((block_b, V), emb_dtype)],
        compiler_params=pltpu.CompilerParams(
            dimension_semantics=("parallel", "arbitrary"),
            vmem_limit_bytes=vmem_limit),
        cost_estimate=cost1,
    )(embeddings, mask3)

    # ---------------------- call 2: top-k selection -----------------------------
    grid2 = (B_pad // block_b,)
    cost2 = pl.CostEstimate(
        flops=7 * top_k * B_pad * V,
        transcendentals=0,
        bytes_accessed=B_pad * V * (4 + jnp.dtype(out_dtype).itemsize),
    )
    out = pl.pallas_call(
        functools.partial(_splade_topk_kernel, top_k=top_k),
        out_shape=jax.ShapeDtypeStruct((B_pad, V), out_dtype),
        grid=grid2,
        in_specs=[pl.BlockSpec((block_b, V), lambda i: (i, 0))],
        out_specs=pl.BlockSpec((block_b, V), lambda i: (i, 0)),
        compiler_params=pltpu.CompilerParams(
            dimension_semantics=("parallel",),
            vmem_limit_bytes=vmem_limit),
        cost_estimate=cost2,
    )(x)

    return out[:B]


def _reference(embeddings, attention_mask, top_k):
    """Pure-JAX reference mirroring the PyTorch forward."""
    x = jnp.max(jnp.log1p(jax.nn.relu(embeddings)) * attention_mask[:, :, None], axis=1)
    kvals, kidx = jax.lax.top_k(x, top_k)
    rows = jnp.arange(x.shape[0])[:, None]
    out = jnp.zeros_like(x).at[rows, kidx].set(kvals)
    return out


if __name__ == "__main__":
    # Small, deterministic example: batch=2, seq=8, vocab=128, top_k=4.
    key = jax.random.PRNGKey(0)
    k_emb, k_mask = jax.random.split(key)

    B, L, V, TOP_K = 2, 8, 128, 4
    embeddings = jax.random.normal(k_emb, (B, L, V), dtype=jnp.float32)
    # Binary 0/1 attention mask; ensure at least the first token is valid.
    mask_bits = (jax.random.uniform(k_mask, (B, L)) > 0.3).astype(jnp.float32)
    attention_mask = mask_bits.at[:, 0].set(1.0)

    out = jax.block_until_ready(splade_pooler(embeddings, attention_mask, TOP_K))

    ref = _reference(embeddings, attention_mask, TOP_K)
    assert out.shape == (B, V)
    assert jnp.allclose(out, ref, atol=1e-5, rtol=1e-5), "mismatch vs reference"

    print("KERNEL_OK")
</pallas_src>

<mosaic_0001>
module attributes {stable_mosaic.version = 11 : i64} {
  func.func @_splade_reduce_kernel(%arg0: i32, %arg1: i32, %arg2: memref<2x8x128xf32, #tpu.memory_space<vmem>>, %arg3: memref<2x8x1xf32, #tpu.memory_space<vmem>>, %arg4: memref<2x128xf32, #tpu.memory_space<vmem>>, %arg5: memref<2x128xf32, #tpu.memory_space<vmem>>) attributes {dimension_semantics = [#tpu.dimension_semantics<parallel>, #tpu.dimension_semantics<arbitrary>], iteration_bounds = array<i64: 1, 1>, scalar_prefetch = 0 : i64, scratch_operands = 1 : i64, tpu.core_type = #tpu.core_type<tc>, window_params = [{transform_indices = @transform_0, window_bounds = array<i64: 2, 8, 128>}, {transform_indices = @transform_1, window_bounds = array<i64: 2, 8, 1>}, {transform_indices = @transform_2, window_bounds = array<i64: 2, 128>}]} {
    %c0_i32 = arith.constant 0 : i32
    %0 = arith.cmpi eq, %arg1, %c0_i32 : i32
    %1 = arith.extui %0 : i1 to i32
    %c0_i32_0 = arith.constant 0 : i32
    %2 = arith.cmpi ne, %1, %c0_i32_0 : i32
    scf.if %2 {
      %cst_12 = arith.constant 0.000000e+00 : f32
      %14 = vector.broadcast %cst_12 : f32 to vector<2x128xf32>
      %c0_13 = arith.constant 0 : index
      %c0_14 = arith.constant 0 : index
      %15 = vector.load %arg5[%c0_13, %c0_14] : memref<2x128xf32, #tpu.memory_space<vmem>>, vector<2x128xf32>
      tpu.vector_store %arg5[%c0_13, %c0_14], %14 {strides = array<i32>} : memref<2x128xf32, #tpu.memory_space<vmem>>, vector<2x128xf32>,
    } else {
    }
    %c0 = arith.constant 0 : index
    %c0_1 = arith.constant 0 : index
    %c0_2 = arith.constant 0 : index
    %3 = vector.load %arg2[%c0, %c0_1, %c0_2] : memref<2x8x128xf32, #tpu.memory_space<vmem>>, vector<2x8x128xf32>
    %c0_3 = arith.constant 0 : index
    %c0_4 = arith.constant 0 : index
    %c0_5 = arith.constant 0 : index
    %4 = vector.load %arg3[%c0_3, %c0_4, %c0_5] : memref<2x8x1xf32, #tpu.memory_space<vmem>>, vector<2x8x1xf32>
    %5 = vector.broadcast %4 : vector<2x8x1xf32> to vector<2x8x128xf32>
    %6 = arith.mulf %3, %5 : vector<2x8x128xf32>
    %cst = arith.constant dense<0xFF800000> : vector<2x128xf32>
    %7 = vector.multi_reduction <maximumf>, %6, %cst [1] : vector<2x8x128xf32> to vector<2x128xf32>
    %c0_6 = arith.constant 0 : index
    %c0_7 = arith.constant 0 : index
    %8 = vector.load %arg5[%c0_6, %c0_7] : memref<2x128xf32, #tpu.memory_space<vmem>>, vector<2x128xf32>
    %9 = arith.maximumf %8, %7 : vector<2x128xf32>
    %c0_8 = arith.constant 0 : index
    %c0_9 = arith.constant 0 : index
    %10 = vector.load %arg5[%c0_8, %c0_9] : memref<2x128xf32, #tpu.memory_space<vmem>>, vector<2x128xf32>
    tpu.vector_store %arg5[%c0_8, %c0_9], %9 {strides = array<i32>} : memref<2x128xf32, #tpu.memory_space<vmem>>, vector<2x128xf32>,
    %c0_i32_10 = arith.constant 0 : i32
    %11 = arith.cmpi eq, %arg1, %c0_i32_10 : i32
    %12 = arith.extui %11 : i1 to i32
    %c0_i32_11 = arith.constant 0 : i32
    %13 = arith.cmpi ne, %12, %c0_i32_11 : i32
    scf.if %13 {
      %c0_12 = arith.constant 0 : index
      %c0_13 = arith.constant 0 : index
      %14 = vector.load %arg5[%c0_12, %c0_13] : memref<2x128xf32, #tpu.memory_space<vmem>>, vector<2x128xf32>
      %15 = math.log1p %14 : vector<2x128xf32>
      %c0_14 = arith.constant 0 : index
      %c0_15 = arith.constant 0 : index
      %16 = vector.load %arg4[%c0_14, %c0_15] : memref<2x128xf32, #tpu.memory_space<vmem>>, vector<2x128xf32>
      tpu.vector_store %arg4[%c0_14, %c0_15], %15 {strides = array<i32>} : memref<2x128xf32, #tpu.memory_space<vmem>>, vector<2x128xf32>,
    } else {
    }
    return
  }
  func.func @transform_0(%arg0: i32, %arg1: i32) -> (i32, i32, i32) {
    %c0_i32 = arith.constant 0 : i32
    %c0_i32_0 = arith.constant 0 : i32
    return %arg0, %arg1, %c0_i32 : i32, i32, i32
  }
  func.func @transform_1(%arg0: i32, %arg1: i32) -> (i32, i32, i32) {
    %c0_i32 = arith.constant 0 : i32
    %c0_i32_0 = arith.constant 0 : i32
    return %arg0, %arg1, %c0_i32 : i32, i32, i32
  }
  func.func @transform_2(%arg0: i32, %arg1: i32) -> (i32, i32) {
    %c0_i32 = arith.constant 0 : i32
    %c0_i32_0 = arith.constant 0 : i32
    return %arg0, %c0_i32 : i32, i32
  }
}

</mosaic_0001>

<llo_original>
// kernel: tpu_custom_call.1
$region0: #{tpu_custom_call.1}
  #allocation0 [shape = 'u32[]', space=smem, size = 0x4, offset = 0x4, fixed_abs, tag = 'smem constant byte address 0x4 - core index']
  #allocation1 [shape = 'u32[144,128]{1,0:T(1,128)}', space=vmem, size = 0x12000, scoped, tag = 'internal scratch']
  #allocation2 [shape = 'f32[2,128]{1,0:T(2,128)}', space=vmem, size = 0x400, scoped, tag = 'scratch operand']
  %s0 = inlined_call_operand.vmem [shape: f32[2,8,128], index: 0, kind: input, shape index: {}]
  %s1 = inlined_call_operand.vmem [shape: f32[2,8,1], index: 1, kind: input, shape index: {}]
  %s2 = inlined_call_operand.hbm [shape: f32[2,128], index: 2, kind: output, shape index: {}]
  %s3 = sld [smem:[#allocation0]]
  $region26: #{tpu_custom_call.1} parent=0
    _
  %s5 = ssub.s32 1, %s3
  %s6 = scalar_select 0, %s5, %s3
  $region1: #{tpu_custom_call.1} parent=0
    #allocation3 [shape = 'u8[1024]{0}', space=vmem, size = 0x400, scoped, tag = 'output window, operand 0, single buffered']
    #allocation4 [shape = 's32[1]{0}', space=sflag, size = 0x4, scoped, tag = 'scoped memory for tpu_custom_call.1']
    %7 = vsyncpa [#allocation4], 0
    // Predicated region
    $region2: #{tpu_custom_call.1} parent=1 // pred_check
      _
    $region3: #{tpu_custom_call.1} parent=1 // pred_check_branch
      %9 = sbr.rel (0) target = $region5
    $region4: #{tpu_custom_call.1} parent=1 // pred_region
      _
    $region5: #{tpu_custom_call.1} parent=1 // pred_fallthru
      _
    // Predicated region
    $region6: #{tpu_custom_call.1} parent=1 // pred_check
      _
    $region7: #{tpu_custom_call.1} parent=1 // pred_check_branch
      %11 = sbr.rel (0) target = $region9
    $region8: #{tpu_custom_call.1} parent=1 // pred_region
      _
    $region9: #{tpu_custom_call.1} parent=1 // pred_fallthru
      _
    %p12 = scmp.eq.s32.totalorder 0, 0
    // Predicated region
    $region10: #{tpu_custom_call.1} parent=1 // pred_check
      %p13 = pneg %p12
    $region11: #{tpu_custom_call.1} parent=1 // pred_check_branch
      %15 = sbr.rel (%p13) target = $region13
    $region12: #{tpu_custom_call.1} parent=1 // pred_region
      %16 = vst [vmem:[#allocation2] sm:$0x3] 0.0
    $region13: #{tpu_custom_call.1} parent=1 // pred_fallthru
      _
    %v17 = vld [vmem:[%s0] sm:$0xff]
    %v18 = vld [vmem:[%s0 + $0x8] sm:$0xff]
    %v19 = vld [vmem:[%s1] sm:$0xff]
    %v20 = vld [vmem:[%s1 + $0x8] sm:$0xff]
    %22 = vset.pattern.permute.xlu0 0
    %23 = vperm.xlu0 %22, %v19
    %v24 = vpop.permute.xlu0 %23
    %27 = vset.pattern.permute.xlu0 0
    %28 = vperm.xlu0 %27, %v20
    %v29 = vpop.permute.xlu0 %28
    %v31 = vmul.f32 %v17, %v24
    %v32 = vmul.f32 %v18, %v29
    %v33 = vrot.slane %v31, 4
    %v34 = vmax.f32 %v31, %v33
    %v35 = vrot.slane %v34, 2
    %v36 = vmax.f32 %v34, %v35
    %v37 = vrot.slane %v36, 1
    %v38 = vmax.f32 %v36, %v37
    %v39 = vrot.slane %v32, 4
    %v40 = vmax.f32 %v32, %v39
    %v41 = vrot.slane %v40, 2
    %v42 = vmax.f32 %v40, %v41
    %v43 = vrot.slane %v42, 1
    %v44 = vmax.f32 %v42, %v43
    %v45 = vld [vmem:[#allocation2] sm:$0x3]
    %vm48 = vcmask 1041409
    %v49 = vsel %vm48, %v44, %v38
    %v51 = vmax.f32 %v45, %v49
    %52 = vst [vmem:[#allocation2] sm:$0x3] %v51
    // Predicated region
    $region14: #{tpu_custom_call.1} parent=1 // pred_check
      %p53 = pneg %p12
    $region15: #{tpu_custom_call.1} parent=1 // pred_check_branch
      %55 = sbr.rel (%p53) target = $region17
    $region16: #{tpu_custom_call.1} parent=1 // pred_region
      %v56 = vld [vmem:[#allocation2] sm:$0x3]
      %v57 = vadd.f32 %v56, 1.0
      %v58 = vlog2.pop %v57
      %v59 = vmul.f32 %v58, 0.6931472
      %v60 = vmul.f32 -0.5, %v56
      %v61 = vadd.f32 %v60, 1.0
      %v62 = vmul.f32 %v61, %v56
      %v63 = vand.u32 2147483647, %v56
      %vm64 = vcmp.lt.f32.partialorder %v63, 0.0004427343
      %v65 = vsel %vm64, %v62, %v59
      %66 = vst [vmem:[#allocation3] sm:$0x3] %v65
    $region17: #{tpu_custom_call.1} parent=1 // pred_fallthru
      _
    // Predicated region
    $region18: #{tpu_custom_call.1} parent=1 // pred_check
      _
    $region19: #{tpu_custom_call.1} parent=1 // pred_check_branch
      %68 = sbr.rel (0) target = $region21
    $region20: #{tpu_custom_call.1} parent=1 // pred_region
      %s70 = ssub.s32 32, 32
      %71 = vsyncadd [#allocation4], %s70
      %s73 = sshll.u32 [#allocation3], 4
      %s74 = int_to_ptr.vmem [resolvable:$true] %s73
      %76 = dma.vmem_to_hbm [thread:$0]  %s74, 32, %s2, [#allocation4]
    $region21: #{tpu_custom_call.1} parent=1 // pred_fallthru
      _
    // Predicated region
    $region22: #{tpu_custom_call.1} parent=1 // pred_check
      _
    $region23: #{tpu_custom_call.1} parent=1 // pred_check_branch
      %78 = sbr.rel (0) target = $region25
    $region24: #{tpu_custom_call.1} parent=1 // pred_region
      %79 = dma.done [#allocation4], 32
    $region25: #{tpu_custom_call.1} parent=1 // pred_fallthru
      _
    %80 = vsyncpa [#allocation4], 1

</llo_original>
